<compile_context>
chip_gen: v5e
topology: v5e:2x2
jax: 0.10.0
libtpu: 0.0.40
codegen_flags: <defaults>
</compile_context>

<pallas_src>
import functools

import jax
import jax.numpy as jnp
from jax.experimental import pallas as pl
from jax.experimental.pallas import tpu as pltpu

LANES = 128   # lanes per batch group
R_OUT = 25    # output rows: a1(3) t1(3) a2(3) t2(3) a3(3) t3(3) a4(3) t4(3) y(1)

# (n_in, n_out) per layer, PyTorch nn.Linear semantics: out_j = sum_i W[j,i]*h_i + b_j
_LAYER_DIMS = ((2, 3), (3, 3), (3, 3), (3, 3), (3, 1))


def _layer_offsets():
    offs, o = [], 0
    for n_in, n_out in _LAYER_DIMS:
        offs.append((o, o + n_in * n_out))        # (weight offset, bias offset)
        o += n_in * n_out + n_out
    return tuple(offs), o


_OFFS, N_PARAMS = _layer_offsets()                # N_PARAMS == 49


def _mlp_kernel(x_ref, p_ref, o_ref):
    """x_ref: [2, G, 128] VMEM, p_ref: f32[49] SMEM, o_ref: [25, G, 128] VMEM."""

    def layer(h, l):
        n_in, n_out = _LAYER_DIMS[l]
        w_off, b_off = _OFFS[l]
        outs = []
        for j in range(n_out):
            acc = h[0] * p_ref[w_off + j * n_in]                 # scalar x [G,128] vreg
            for i in range(1, n_in):
                acc = acc + h[i] * p_ref[w_off + j * n_in + i]
            outs.append(acc + p_ref[b_off + j])
        return outs

    h = [x_ref[0], x_ref[1]]                                     # fc1 inputs, [G,128] each
    for l in range(4):
        a = layer(h, l)                                          # pre-activation (3 vregs/row-group)
        t = [jnp.tanh(aj) for aj in a]                           # EUP, full-width
        for j in range(3):
            o_ref[6 * l + j] = a[j]                              # rows 6l..6l+2
            o_ref[6 * l + 3 + j] = t[j]                          # rows 6l+3..6l+5
        h = t
    o_ref[24] = layer(h, 4)[0]                                   # fc5 output row


def pack_params(params):
    """Flatten five (W[out,in], b[out]) pairs into one f32[49] SMEM vector
    (per layer: W row-major, then b)."""
    flat = []
    for w, b in params:
        flat.append(jnp.asarray(w, jnp.float32).reshape(-1))
        flat.append(jnp.asarray(b, jnp.float32).reshape(-1))
    out = jnp.concatenate(flat)
    assert out.shape == (N_PARAMS,)
    return out


def _round_up(n, m):
    return (n + m - 1) // m * m


@functools.partial(jax.jit, static_argnames=("tm",))
def spirals_classifier_3d(x, packed_params, tm=8192):
    """x: [N, 2] f32, packed_params: pack_params(...) output.
    Returns (fc5_out [N,1], [input, a1, t1, a2, t2, a3, t3, a4, t4])."""
    n = x.shape[0]
    # Batch tile: multiple of 1024 so G = tm//128 is a multiple of 8 (full vregs).
    tm = _round_up(min(tm, _round_up(n, 1024)), 1024)
    n_pad = _round_up(n, tm)
    ng = n_pad // LANES
    g = tm // LANES

    xf = x.astype(jnp.float32)
    x_pad = jnp.pad(xf, ((0, n_pad - n), (0, 0)))
    # Batch-in-lanes layout: element n -> (group n // 128, lane n % 128).
    x_t = x_pad.T.reshape(2, ng, LANES)

    packed = pl.pallas_call(
        _mlp_kernel,
        out_shape=jax.ShapeDtypeStruct((R_OUT, ng, LANES), jnp.float32),
        grid=(n_pad // tm,),
        in_specs=[
            pl.BlockSpec((2, g, LANES), lambda i: (0, i, 0)),          # batch tile of x
            pl.BlockSpec(memory_space=pltpu.MemorySpace.SMEM),         # 49 param scalars
        ],
        out_specs=pl.BlockSpec((R_OUT, g, LANES), lambda i: (0, i, 0)),  # [25, N] slab
        compiler_params=pltpu.CompilerParams(
            dimension_semantics=("parallel",)),
    )(x_t, packed_params)

    flat = packed.reshape(R_OUT, n_pad)[:, :n]        # contiguous row slabs
    outputs = [xf] + [flat[3 * k:3 * k + 3].T for k in range(8)]
    return flat[24:25].T, outputs


def _init_params(key):
    """Synthetic init mirroring nn.Linear shapes (weight [out,in], bias [out])."""
    params = []
    for n_in, n_out in _LAYER_DIMS:
        key, kw, kb = jax.random.split(key, 3)
        bound = 1.0 / jnp.sqrt(n_in)
        w = jax.random.uniform(kw, (n_out, n_in), jnp.float32, -bound, bound)
        b = jax.random.uniform(kb, (n_out,), jnp.float32, -bound, bound)
        params.append((w, b))
    return params


def _reference(x, params):
    outputs = [x]
    h = x
    for i, (w, b) in enumerate(params):
        h = h @ w.T + b
        if i < 4:
            outputs.append(h)
            h = jnp.tanh(h)
            outputs.append(h)
        else:
            return h, outputs


if __name__ == "__main__":
    key = jax.random.PRNGKey(0)
    kx, kp = jax.random.split(key)
    n = 2500                      # not a multiple of the tile: exercises batch padding
    x = jax.random.normal(kx, (n, 2), jnp.float32)
    params = _init_params(kp)

    pack = pack_params(params)    # packed once, outside the per-call path
    y, outs = spirals_classifier_3d(x, pack, tm=1024)   # 3 batch tiles on the 1-D grid
    y = jax.block_until_ready(y)
    outs = [jax.block_until_ready(o) for o in outs]

    y_ref, outs_ref = _reference(x, params)
    assert y.shape == (n, 1)
    assert jnp.allclose(y, y_ref, atol=1e-5), "final output mismatch"
    assert len(outs) == len(outs_ref) == 9
    for a, b in zip(outs, outs_ref):
        assert a.shape == b.shape, (a.shape, b.shape)
        assert jnp.allclose(a, b, atol=1e-5), "intermediate mismatch"

    print("KERNEL_OK")
</pallas_src>

<mosaic_0001>
module attributes {stable_mosaic.version = 11 : i64} {
  func.func @_mlp_kernel(%arg0: i32, %arg1: memref<2x8x128xf32, #tpu.memory_space<vmem>>, %arg2: memref<49xf32, #tpu.memory_space<smem>>, %arg3: memref<25x8x128xf32, #tpu.memory_space<vmem>>) attributes {dimension_semantics = [#tpu.dimension_semantics<parallel>], iteration_bounds = array<i64: 3>, scalar_prefetch = 0 : i64, scratch_operands = 0 : i64, tpu.core_type = #tpu.core_type<tc>, window_params = [{transform_indices = @transform_0, window_bounds = array<i64: 2, 8, 128>}, {transform_indices = @transform_1, window_bounds = array<i64: 49>}, {transform_indices = @transform_2, window_bounds = array<i64: 25, 8, 128>}]} {
    %c0 = arith.constant 0 : index
    %c0_0 = arith.constant 0 : index
    %c0_1 = arith.constant 0 : index
    %0 = vector.load %arg1[%c0, %c0_0, %c0_1] : memref<2x8x128xf32, #tpu.memory_space<vmem>>, vector<1x8x128xf32>
    %1 = vector.shape_cast %0 : vector<1x8x128xf32> to vector<8x128xf32>
    %c1 = arith.constant 1 : index
    %c0_2 = arith.constant 0 : index
    %c0_3 = arith.constant 0 : index
    %2 = vector.load %arg1[%c1, %c0_2, %c0_3] : memref<2x8x128xf32, #tpu.memory_space<vmem>>, vector<1x8x128xf32>
    %3 = vector.shape_cast %2 : vector<1x8x128xf32> to vector<8x128xf32>
    %c0_4 = arith.constant 0 : index
    %4 = memref.load %arg2[%c0_4] : memref<49xf32, #tpu.memory_space<smem>>
    %5 = vector.broadcast %4 : f32 to vector<8x128xf32>
    %6 = arith.mulf %1, %5 : vector<8x128xf32>
    %c1_5 = arith.constant 1 : index
    %7 = memref.load %arg2[%c1_5] : memref<49xf32, #tpu.memory_space<smem>>
    %8 = vector.broadcast %7 : f32 to vector<8x128xf32>
    %9 = arith.mulf %3, %8 : vector<8x128xf32>
    %10 = arith.addf %6, %9 : vector<8x128xf32>
    %c6 = arith.constant 6 : index
    %11 = memref.load %arg2[%c6] : memref<49xf32, #tpu.memory_space<smem>>
    %12 = vector.broadcast %11 : f32 to vector<8x128xf32>
    %13 = arith.addf %10, %12 : vector<8x128xf32>
    %c2 = arith.constant 2 : index
    %14 = memref.load %arg2[%c2] : memref<49xf32, #tpu.memory_space<smem>>
    %15 = vector.broadcast %14 : f32 to vector<8x128xf32>
    %16 = arith.mulf %1, %15 : vector<8x128xf32>
    %c3 = arith.constant 3 : index
    %17 = memref.load %arg2[%c3] : memref<49xf32, #tpu.memory_space<smem>>
    %18 = vector.broadcast %17 : f32 to vector<8x128xf32>
    %19 = arith.mulf %3, %18 : vector<8x128xf32>
    %20 = arith.addf %16, %19 : vector<8x128xf32>
    %c7 = arith.constant 7 : index
    %21 = memref.load %arg2[%c7] : memref<49xf32, #tpu.memory_space<smem>>
    %22 = vector.broadcast %21 : f32 to vector<8x128xf32>
    %23 = arith.addf %20, %22 : vector<8x128xf32>
    %c4 = arith.constant 4 : index
    %24 = memref.load %arg2[%c4] : memref<49xf32, #tpu.memory_space<smem>>
    %25 = vector.broadcast %24 : f32 to vector<8x128xf32>
    %26 = arith.mulf %1, %25 : vector<8x128xf32>
    %c5 = arith.constant 5 : index
    %27 = memref.load %arg2[%c5] : memref<49xf32, #tpu.memory_space<smem>>
    %28 = vector.broadcast %27 : f32 to vector<8x128xf32>
    %29 = arith.mulf %3, %28 : vector<8x128xf32>
    %30 = arith.addf %26, %29 : vector<8x128xf32>
    %c8 = arith.constant 8 : index
    %31 = memref.load %arg2[%c8] : memref<49xf32, #tpu.memory_space<smem>>
    %32 = vector.broadcast %31 : f32 to vector<8x128xf32>
    %33 = arith.addf %30, %32 : vector<8x128xf32>
    %34 = math.tanh %13 : vector<8x128xf32>
    %35 = math.tanh %23 : vector<8x128xf32>
    %36 = math.tanh %33 : vector<8x128xf32>
    %c0_6 = arith.constant 0 : index
    %c0_7 = arith.constant 0 : index
    %c0_8 = arith.constant 0 : index
    %37 = vector.load %arg3[%c0_6, %c0_7, %c0_8] : memref<25x8x128xf32, #tpu.memory_space<vmem>>, vector<1x8x128xf32>
    %38 = vector.shape_cast %37 : vector<1x8x128xf32> to vector<8x128xf32>
    %39 = vector.shape_cast %13 : vector<8x128xf32> to vector<1x8x128xf32>
    tpu.vector_store %arg3[%c0_6, %c0_7, %c0_8], %39 {strides = array<i32>} : memref<25x8x128xf32, #tpu.memory_space<vmem>>, vector<1x8x128xf32>,
    %c3_9 = arith.constant 3 : index
    %c0_10 = arith.constant 0 : index
    %c0_11 = arith.constant 0 : index
    %40 = vector.load %arg3[%c3_9, %c0_10, %c0_11] : memref<25x8x128xf32, #tpu.memory_space<vmem>>, vector<1x8x128xf32>
    %41 = vector.shape_cast %40 : vector<1x8x128xf32> to vector<8x128xf32>
    %42 = vector.shape_cast %34 : vector<8x128xf32> to vector<1x8x128xf32>
    tpu.vector_store %arg3[%c3_9, %c0_10, %c0_11], %42 {strides = array<i32>} : memref<25x8x128xf32, #tpu.memory_space<vmem>>, vector<1x8x128xf32>,
    %c1_12 = arith.constant 1 : index
    %c0_13 = arith.constant 0 : index
    %c0_14 = arith.constant 0 : index
    %43 = vector.load %arg3[%c1_12, %c0_13, %c0_14] : memref<25x8x128xf32, #tpu.memory_space<vmem>>, vector<1x8x128xf32>
    %44 = vector.shape_cast %43 : vector<1x8x128xf32> to vector<8x128xf32>
    %45 = vector.shape_cast %23 : vector<8x128xf32> to vector<1x8x128xf32>
    tpu.vector_store %arg3[%c1_12, %c0_13, %c0_14], %45 {strides = array<i32>} : memref<25x8x128xf32, #tpu.memory_space<vmem>>, vector<1x8x128xf32>,
    %c4_15 = arith.constant 4 : index
    %c0_16 = arith.constant 0 : index
    %c0_17 = arith.constant 0 : index
    %46 = vector.load %arg3[%c4_15, %c0_16, %c0_17] : memref<25x8x128xf32, #tpu.memory_space<vmem>>, vector<1x8x128xf32>
    %47 = vector.shape_cast %46 : vector<1x8x128xf32> to vector<8x128xf32>
    %48 = vector.shape_cast %35 : vector<8x128xf32> to vector<1x8x128xf32>
    tpu.vector_store %arg3[%c4_15, %c0_16, %c0_17], %48 {strides = array<i32>} : memref<25x8x128xf32, #tpu.memory_space<vmem>>, vector<1x8x128xf32>,
    %c2_18 = arith.constant 2 : index
    %c0_19 = arith.constant 0 : index
    %c0_20 = arith.constant 0 : index
    %49 = vector.load %arg3[%c2_18, %c0_19, %c0_20] : memref<25x8x128xf32, #tpu.memory_space<vmem>>, vector<1x8x128xf32>
    %50 = vector.shape_cast %49 : vector<1x8x128xf32> to vector<8x128xf32>
    %51 = vector.shape_cast %33 : vector<8x128xf32> to vector<1x8x128xf32>
    tpu.vector_store %arg3[%c2_18, %c0_19, %c0_20], %51 {strides = array<i32>} : memref<25x8x128xf32, #tpu.memory_space<vmem>>, vector<1x8x128xf32>,
    %c5_21 = arith.constant 5 : index
    %c0_22 = arith.constant 0 : index
    %c0_23 = arith.constant 0 : index
    %52 = vector.load %arg3[%c5_21, %c0_22, %c0_23] : memref<25x8x128xf32, #tpu.memory_space<vmem>>, vector<1x8x128xf32>
    %53 = vector.shape_cast %52 : vector<1x8x128xf32> to vector<8x128xf32>
    %54 = vector.shape_cast %36 : vector<8x128xf32> to vector<1x8x128xf32>
    tpu.vector_store %arg3[%c5_21, %c0_22, %c0_23], %54 {strides = array<i32>} : memref<25x8x128xf32, #tpu.memory_space<vmem>>, vector<1x8x128xf32>,
    %c9 = arith.constant 9 : index
    %55 = memref.load %arg2[%c9] : memref<49xf32, #tpu.memory_space<smem>>
    %56 = vector.broadcast %55 : f32 to vector<8x128xf32>
    %57 = arith.mulf %34, %56 : vector<8x128xf32>
    %c10 = arith.constant 10 : index
    %58 = memref.load %arg2[%c10] : memref<49xf32, #tpu.memory_space<smem>>
    %59 = vector.broadcast %58 : f32 to vector<8x128xf32>
    %60 = arith.mulf %35, %59 : vector<8x128xf32>
    %61 = arith.addf %57, %60 : vector<8x128xf32>
    %c11 = arith.constant 11 : index
    %62 = memref.load %arg2[%c11] : memref<49xf32, #tpu.memory_space<smem>>
    %63 = vector.broadcast %62 : f32 to vector<8x128xf32>
    %64 = arith.mulf %36, %63 : vector<8x128xf32>
    %65 = arith.addf %61, %64 : vector<8x128xf32>
    %c18 = arith.constant 18 : index
    %66 = memref.load %arg2[%c18] : memref<49xf32, #tpu.memory_space<smem>>
    %67 = vector.broadcast %66 : f32 to vector<8x128xf32>
    %68 = arith.addf %65, %67 : vector<8x128xf32>
    %c12 = arith.constant 12 : index
    %69 = memref.load %arg2[%c12] : memref<49xf32, #tpu.memory_space<smem>>
    %70 = vector.broadcast %69 : f32 to vector<8x128xf32>
    %71 = arith.mulf %34, %70 : vector<8x128xf32>
    %c13 = arith.constant 13 : index
    %72 = memref.load %arg2[%c13] : memref<49xf32, #tpu.memory_space<smem>>
    %73 = vector.broadcast %72 : f32 to vector<8x128xf32>
    %74 = arith.mulf %35, %73 : vector<8x128xf32>
    %75 = arith.addf %71, %74 : vector<8x128xf32>
    %c14 = arith.constant 14 : index
    %76 = memref.load %arg2[%c14] : memref<49xf32, #tpu.memory_space<smem>>
    %77 = vector.broadcast %76 : f32 to vector<8x128xf32>
    %78 = arith.mulf %36, %77 : vector<8x128xf32>
    %79 = arith.addf %75, %78 : vector<8x128xf32>
    %c19 = arith.constant 19 : index
    %80 = memref.load %arg2[%c19] : memref<49xf32, #tpu.memory_space<smem>>
    %81 = vector.broadcast %80 : f32 to vector<8x128xf32>
    %82 = arith.addf %79, %81 : vector<8x128xf32>
    %c15 = arith.constant 15 : index
    %83 = memref.load %arg2[%c15] : memref<49xf32, #tpu.memory_space<smem>>
    %84 = vector.broadcast %83 : f32 to vector<8x128xf32>
    %85 = arith.mulf %34, %84 : vector<8x128xf32>
    %c16 = arith.constant 16 : index
    %86 = memref.load %arg2[%c16] : memref<49xf32, #tpu.memory_space<smem>>
    %87 = vector.broadcast %86 : f32 to vector<8x128xf32>
    %88 = arith.mulf %35, %87 : vector<8x128xf32>
    %89 = arith.addf %85, %88 : vector<8x128xf32>
    %c17 = arith.constant 17 : index
    %90 = memref.load %arg2[%c17] : memref<49xf32, #tpu.memory_space<smem>>
    %91 = vector.broadcast %90 : f32 to vector<8x128xf32>
    %92 = arith.mulf %36, %91 : vector<8x128xf32>
    %93 = arith.addf %89, %92 : vector<8x128xf32>
    %c20 = arith.constant 20 : index
    %94 = memref.load %arg2[%c20] : memref<49xf32, #tpu.memory_space<smem>>
    %95 = vector.broadcast %94 : f32 to vector<8x128xf32>
    %96 = arith.addf %93, %95 : vector<8x128xf32>
    %97 = math.tanh %68 : vector<8x128xf32>
    %98 = math.tanh %82 : vector<8x128xf32>
    %99 = math.tanh %96 : vector<8x128xf32>
    %c6_24 = arith.constant 6 : index
    %c0_25 = arith.constant 0 : index
    %c0_26 = arith.constant 0 : index
    %100 = vector.load %arg3[%c6_24, %c0_25, %c0_26] : memref<25x8x128xf32, #tpu.memory_space<vmem>>, vector<1x8x128xf32>
    %101 = vector.shape_cast %100 : vector<1x8x128xf32> to vector<8x128xf32>
    %102 = vector.shape_cast %68 : vector<8x128xf32> to vector<1x8x128xf32>
    tpu.vector_store %arg3[%c6_24, %c0_25, %c0_26], %102 {strides = array<i32>} : memref<25x8x128xf32, #tpu.memory_space<vmem>>, vector<1x8x128xf32>,
    %c9_27 = arith.constant 9 : index
    %c0_28 = arith.constant 0 : index
    %c0_29 = arith.constant 0 : index
    %103 = vector.load %arg3[%c9_27, %c0_28, %c0_29] : memref<25x8x128xf32, #tpu.memory_space<vmem>>, vector<1x8x128xf32>
    %104 = vector.shape_cast %103 : vector<1x8x128xf32> to vector<8x128xf32>
    %105 = vector.shape_cast %97 : vector<8x128xf32> to vector<1x8x128xf32>
    tpu.vector_store %arg3[%c9_27, %c0_28, %c0_29], %105 {strides = array<i32>} : memref<25x8x128xf32, #tpu.memory_space<vmem>>, vector<1x8x128xf32>,
    %c7_30 = arith.constant 7 : index
    %c0_31 = arith.constant 0 : index
    %c0_32 = arith.constant 0 : index
    %106 = vector.load %arg3[%c7_30, %c0_31, %c0_32] : memref<25x8x128xf32, #tpu.memory_space<vmem>>, vector<1x8x128xf32>
    %107 = vector.shape_cast %106 : vector<1x8x128xf32> to vector<8x128xf32>
    %108 = vector.shape_cast %82 : vector<8x128xf32> to vector<1x8x128xf32>
    tpu.vector_store %arg3[%c7_30, %c0_31, %c0_32], %108 {strides = array<i32>} : memref<25x8x128xf32, #tpu.memory_space<vmem>>, vector<1x8x128xf32>,
    %c10_33 = arith.constant 10 : index
    %c0_34 = arith.constant 0 : index
    %c0_35 = arith.constant 0 : index
    %109 = vector.load %arg3[%c10_33, %c0_34, %c0_35] : memref<25x8x128xf32, #tpu.memory_space<vmem>>, vector<1x8x128xf32>
    %110 = vector.shape_cast %109 : vector<1x8x128xf32> to vector<8x128xf32>
    %111 = vector.shape_cast %98 : vector<8x128xf32> to vector<1x8x128xf32>
    tpu.vector_store %arg3[%c10_33, %c0_34, %c0_35], %111 {strides = array<i32>} : memref<25x8x128xf32, #tpu.memory_space<vmem>>, vector<1x8x128xf32>,
    %c8_36 = arith.constant 8 : index
    %c0_37 = arith.constant 0 : index
    %c0_38 = arith.constant 0 : index
    %112 = vector.load %arg3[%c8_36, %c0_37, %c0_38] : memref<25x8x128xf32, #tpu.memory_space<vmem>>, vector<1x8x128xf32>
    %113 = vector.shape_cast %112 : vector<1x8x128xf32> to vector<8x128xf32>
    %114 = vector.shape_cast %96 : vector<8x128xf32> to vector<1x8x128xf32>
    tpu.vector_store %arg3[%c8_36, %c0_37, %c0_38], %114 {strides = array<i32>} : memref<25x8x128xf32, #tpu.memory_space<vmem>>, vector<1x8x128xf32>,
    %c11_39 = arith.constant 11 : index
    %c0_40 = arith.constant 0 : index
    %c0_41 = arith.constant 0 : index
    %115 = vector.load %arg3[%c11_39, %c0_40, %c0_41] : memref<25x8x128xf32, #tpu.memory_space<vmem>>, vector<1x8x128xf32>
    %116 = vector.shape_cast %115 : vector<1x8x128xf32> to vector<8x128xf32>
    %117 = vector.shape_cast %99 : vector<8x128xf32> to vector<1x8x128xf32>
    tpu.vector_store %arg3[%c11_39, %c0_40, %c0_41], %117 {strides = array<i32>} : memref<25x8x128xf32, #tpu.memory_space<vmem>>, vector<1x8x128xf32>,
    %c21 = arith.constant 21 : index
    %118 = memref.load %arg2[%c21] : memref<49xf32, #tpu.memory_space<smem>>
    %119 = vector.broadcast %118 : f32 to vector<8x128xf32>
    %120 = arith.mulf %97, %119 : vector<8x128xf32>
    %c22 = arith.constant 22 : index
    %121 = memref.load %arg2[%c22] : memref<49xf32, #tpu.memory_space<smem>>
    %122 = vector.broadcast %121 : f32 to vector<8x128xf32>
    %123 = arith.mulf %98, %122 : vector<8x128xf32>
    %124 = arith.addf %120, %123 : vector<8x128xf32>
    %c23 = arith.constant 23 : index
    %125 = memref.load %arg2[%c23] : memref<49xf32, #tpu.memory_space<smem>>
    %126 = vector.broadcast %125 : f32 to vector<8x128xf32>
    %127 = arith.mulf %99, %126 : vector<8x128xf32>
    %128 = arith.addf %124, %127 : vector<8x128xf32>
    %c30 = arith.constant 30 : index
    %129 = memref.load %arg2[%c30] : memref<49xf32, #tpu.memory_space<smem>>
    %130 = vector.broadcast %129 : f32 to vector<8x128xf32>
    %131 = arith.addf %128, %130 : vector<8x128xf32>
    %c24 = arith.constant 24 : index
    %132 = memref.load %arg2[%c24] : memref<49xf32, #tpu.memory_space<smem>>
    %133 = vector.broadcast %132 : f32 to vector<8x128xf32>
    %134 = arith.mulf %97, %133 : vector<8x128xf32>
    %c25 = arith.constant 25 : index
    %135 = memref.load %arg2[%c25] : memref<49xf32, #tpu.memory_space<smem>>
    %136 = vector.broadcast %135 : f32 to vector<8x128xf32>
    %137 = arith.mulf %98, %136 : vector<8x128xf32>
    %138 = arith.addf %134, %137 : vector<8x128xf32>
    %c26 = arith.constant 26 : index
    %139 = memref.load %arg2[%c26] : memref<49xf32, #tpu.memory_space<smem>>
    %140 = vector.broadcast %139 : f32 to vector<8x128xf32>
    %141 = arith.mulf %99, %140 : vector<8x128xf32>
    %142 = arith.addf %138, %141 : vector<8x128xf32>
    %c31 = arith.constant 31 : index
    %143 = memref.load %arg2[%c31] : memref<49xf32, #tpu.memory_space<smem>>
    %144 = vector.broadcast %143 : f32 to vector<8x128xf32>
    %145 = arith.addf %142, %144 : vector<8x128xf32>
    %c27 = arith.constant 27 : index
    %146 = memref.load %arg2[%c27] : memref<49xf32, #tpu.memory_space<smem>>
    %147 = vector.broadcast %146 : f32 to vector<8x128xf32>
    %148 = arith.mulf %97, %147 : vector<8x128xf32>
    %c28 = arith.constant 28 : index
    %149 = memref.load %arg2[%c28] : memref<49xf32, #tpu.memory_space<smem>>
    %150 = vector.broadcast %149 : f32 to vector<8x128xf32>
    %151 = arith.mulf %98, %150 : vector<8x128xf32>
    %152 = arith.addf %148, %151 : vector<8x128xf32>
    %c29 = arith.constant 29 : index
    %153 = memref.load %arg2[%c29] : memref<49xf32, #tpu.memory_space<smem>>
    %154 = vector.broadcast %153 : f32 to vector<8x128xf32>
    %155 = arith.mulf %99, %154 : vector<8x128xf32>
    %156 = arith.addf %152, %155 : vector<8x128xf32>
    %c32 = arith.constant 32 : index
    %157 = memref.load %arg2[%c32] : memref<49xf32, #tpu.memory_space<smem>>
    %158 = vector.broadcast %157 : f32 to vector<8x128xf32>
    %159 = arith.addf %156, %158 : vector<8x128xf32>
    %160 = math.tanh %131 : vector<8x128xf32>
    %161 = math.tanh %145 : vector<8x128xf32>
    %162 = math.tanh %159 : vector<8x128xf32>
    %c12_42 = arith.constant 12 : index
    %c0_43 = arith.constant 0 : index
    %c0_44 = arith.constant 0 : index
    %163 = vector.load %arg3[%c12_42, %c0_43, %c0_44] : memref<25x8x128xf32, #tpu.memory_space<vmem>>, vector<1x8x128xf32>
    %164 = vector.shape_cast %163 : vector<1x8x128xf32> to vector<8x128xf32>
    %165 = vector.shape_cast %131 : vector<8x128xf32> to vector<1x8x128xf32>
    tpu.vector_store %arg3[%c12_42, %c0_43, %c0_44], %165 {strides = array<i32>} : memref<25x8x128xf32, #tpu.memory_space<vmem>>, vector<1x8x128xf32>,
    %c15_45 = arith.constant 15 : index
    %c0_46 = arith.constant 0 : index
    %c0_47 = arith.constant 0 : index
    %166 = vector.load %arg3[%c15_45, %c0_46, %c0_47] : memref<25x8x128xf32, #tpu.memory_space<vmem>>, vector<1x8x128xf32>
    %167 = vector.shape_cast %166 : vector<1x8x128xf32> to vector<8x128xf32>
    %168 = vector.shape_cast %160 : vector<8x128xf32> to vector<1x8x128xf32>
    tpu.vector_store %arg3[%c15_45, %c0_46, %c0_47], %168 {strides = array<i32>} : memref<25x8x128xf32, #tpu.memory_space<vmem>>, vector<1x8x128xf32>,
    %c13_48 = arith.constant 13 : index
    %c0_49 = arith.constant 0 : index
    %c0_50 = arith.constant 0 : index
    %169 = vector.load %arg3[%c13_48, %c0_49, %c0_50] : memref<25x8x128xf32, #tpu.memory_space<vmem>>, vector<1x8x128xf32>
    %170 = vector.shape_cast %169 : vector<1x8x128xf32> to vector<8x128xf32>
    %171 = vector.shape_cast %145 : vector<8x128xf32> to vector<1x8x128xf32>
    tpu.vector_store %arg3[%c13_48, %c0_49, %c0_50], %171 {strides = array<i32>} : memref<25x8x128xf32, #tpu.memory_space<vmem>>, vector<1x8x128xf32>,
    %c16_51 = arith.constant 16 : index
    %c0_52 = arith.constant 0 : index
    %c0_53 = arith.constant 0 : index
    %172 = vector.load %arg3[%c16_51, %c0_52, %c0_53] : memref<25x8x128xf32, #tpu.memory_space<vmem>>, vector<1x8x128xf32>
    %173 = vector.shape_cast %172 : vector<1x8x128xf32> to vector<8x128xf32>
    %174 = vector.shape_cast %161 : vector<8x128xf32> to vector<1x8x128xf32>
    tpu.vector_store %arg3[%c16_51, %c0_52, %c0_53], %174 {strides = array<i32>} : memref<25x8x128xf32, #tpu.memory_space<vmem>>, vector<1x8x128xf32>,
    %c14_54 = arith.constant 14 : index
    %c0_55 = arith.constant 0 : index
    %c0_56 = arith.constant 0 : index
    %175 = vector.load %arg3[%c14_54, %c0_55, %c0_56] : memref<25x8x128xf32, #tpu.memory_space<vmem>>, vector<1x8x128xf32>
    %176 = vector.shape_cast %175 : vector<1x8x128xf32> to vector<8x128xf32>
    %177 = vector.shape_cast %159 : vector<8x128xf32> to vector<1x8x128xf32>
    tpu.vector_store %arg3[%c14_54, %c0_55, %c0_56], %177 {strides = array<i32>} : memref<25x8x128xf32, #tpu.memory_space<vmem>>, vector<1x8x128xf32>,
    %c17_57 = arith.constant 17 : index
    %c0_58 = arith.constant 0 : index
    %c0_59 = arith.constant 0 : index
    %178 = vector.load %arg3[%c17_57, %c0_58, %c0_59] : memref<25x8x128xf32, #tpu.memory_space<vmem>>, vector<1x8x128xf32>
    %179 = vector.shape_cast %178 : vector<1x8x128xf32> to vector<8x128xf32>
    %180 = vector.shape_cast %162 : vector<8x128xf32> to vector<1x8x128xf32>
    tpu.vector_store %arg3[%c17_57, %c0_58, %c0_59], %180 {strides = array<i32>} : memref<25x8x128xf32, #tpu.memory_space<vmem>>, vector<1x8x128xf32>,
    %c33 = arith.constant 33 : index
    %181 = memref.load %arg2[%c33] : memref<49xf32, #tpu.memory_space<smem>>
    %182 = vector.broadcast %181 : f32 to vector<8x128xf32>
    %183 = arith.mulf %160, %182 : vector<8x128xf32>
    %c34 = arith.constant 34 : index
    %184 = memref.load %arg2[%c34] : memref<49xf32, #tpu.memory_space<smem>>
    %185 = vector.broadcast %184 : f32 to vector<8x128xf32>
    %186 = arith.mulf %161, %185 : vector<8x128xf32>
    %187 = arith.addf %183, %186 : vector<8x128xf32>
    %c35 = arith.constant 35 : index
    %188 = memref.load %arg2[%c35] : memref<49xf32, #tpu.memory_space<smem>>
    %189 = vector.broadcast %188 : f32 to vector<8x128xf32>
    %190 = arith.mulf %162, %189 : vector<8x128xf32>
    %191 = arith.addf %187, %190 : vector<8x128xf32>
    %c42 = arith.constant 42 : index
    %192 = memref.load %arg2[%c42] : memref<49xf32, #tpu.memory_space<smem>>
    %193 = vector.broadcast %192 : f32 to vector<8x128xf32>
    %194 = arith.addf %191, %193 : vector<8x128xf32>
    %c36 = arith.constant 36 : index
    %195 = memref.load %arg2[%c36] : memref<49xf32, #tpu.memory_space<smem>>
    %196 = vector.broadcast %195 : f32 to vector<8x128xf32>
    %197 = arith.mulf %160, %196 : vector<8x128xf32>
    %c37 = arith.constant 37 : index
    %198 = memref.load %arg2[%c37] : memref<49xf32, #tpu.memory_space<smem>>
    %199 = vector.broadcast %198 : f32 to vector<8x128xf32>
    %200 = arith.mulf %161, %199 : vector<8x128xf32>
    %201 = arith.addf %197, %200 : vector<8x128xf32>
    %c38 = arith.constant 38 : index
    %202 = memref.load %arg2[%c38] : memref<49xf32, #tpu.memory_space<smem>>
    %203 = vector.broadcast %202 : f32 to vector<8x128xf32>
    %204 = arith.mulf %162, %203 : vector<8x128xf32>
    %205 = arith.addf %201, %204 : vector<8x128xf32>
    %c43 = arith.constant 43 : index
    %206 = memref.load %arg2[%c43] : memref<49xf32, #tpu.memory_space<smem>>
    %207 = vector.broadcast %206 : f32 to vector<8x128xf32>
    %208 = arith.addf %205, %207 : vector<8x128xf32>
    %c39 = arith.constant 39 : index
    %209 = memref.load %arg2[%c39] : memref<49xf32, #tpu.memory_space<smem>>
    %210 = vector.broadcast %209 : f32 to vector<8x128xf32>
    %211 = arith.mulf %160, %210 : vector<8x128xf32>
    %c40 = arith.constant 40 : index
    %212 = memref.load %arg2[%c40] : memref<49xf32, #tpu.memory_space<smem>>
    %213 = vector.broadcast %212 : f32 to vector<8x128xf32>
    %214 = arith.mulf %161, %213 : vector<8x128xf32>
    %215 = arith.addf %211, %214 : vector<8x128xf32>
    %c41 = arith.constant 41 : index
    %216 = memref.load %arg2[%c41] : memref<49xf32, #tpu.memory_space<smem>>
    %217 = vector.broadcast %216 : f32 to vector<8x128xf32>
    %218 = arith.mulf %162, %217 : vector<8x128xf32>
    %219 = arith.addf %215, %218 : vector<8x128xf32>
    %c44 = arith.constant 44 : index
    %220 = memref.load %arg2[%c44] : memref<49xf32, #tpu.memory_space<smem>>
    %221 = vector.broadcast %220 : f32 to vector<8x128xf32>
    %222 = arith.addf %219, %221 : vector<8x128xf32>
    %223 = math.tanh %194 : vector<8x128xf32>
    %224 = math.tanh %208 : vector<8x128xf32>
    %225 = math.tanh %222 : vector<8x128xf32>
    %c18_60 = arith.constant 18 : index
    %c0_61 = arith.constant 0 : index
    %c0_62 = arith.constant 0 : index
    %226 = vector.load %arg3[%c18_60, %c0_61, %c0_62] : memref<25x8x128xf32, #tpu.memory_space<vmem>>, vector<1x8x128xf32>
    %227 = vector.shape_cast %226 : vector<1x8x128xf32> to vector<8x128xf32>
    %228 = vector.shape_cast %194 : vector<8x128xf32> to vector<1x8x128xf32>
    tpu.vector_store %arg3[%c18_60, %c0_61, %c0_62], %228 {strides = array<i32>} : memref<25x8x128xf32, #tpu.memory_space<vmem>>, vector<1x8x128xf32>,
    %c21_63 = arith.constant 21 : index
    %c0_64 = arith.constant 0 : index
    %c0_65 = arith.constant 0 : index
    %229 = vector.load %arg3[%c21_63, %c0_64, %c0_65] : memref<25x8x128xf32, #tpu.memory_space<vmem>>, vector<1x8x128xf32>
    %230 = vector.shape_cast %229 : vector<1x8x128xf32> to vector<8x128xf32>
    %231 = vector.shape_cast %223 : vector<8x128xf32> to vector<1x8x128xf32>
    tpu.vector_store %arg3[%c21_63, %c0_64, %c0_65], %231 {strides = array<i32>} : memref<25x8x128xf32, #tpu.memory_space<vmem>>, vector<1x8x128xf32>,
    %c19_66 = arith.constant 19 : index
    %c0_67 = arith.constant 0 : index
    %c0_68 = arith.constant 0 : index
    %232 = vector.load %arg3[%c19_66, %c0_67, %c0_68] : memref<25x8x128xf32, #tpu.memory_space<vmem>>, vector<1x8x128xf32>
    %233 = vector.shape_cast %232 : vector<1x8x128xf32> to vector<8x128xf32>
    %234 = vector.shape_cast %208 : vector<8x128xf32> to vector<1x8x128xf32>
    tpu.vector_store %arg3[%c19_66, %c0_67, %c0_68], %234 {strides = array<i32>} : memref<25x8x128xf32, #tpu.memory_space<vmem>>, vector<1x8x128xf32>,
    %c22_69 = arith.constant 22 : index
    %c0_70 = arith.constant 0 : index
    %c0_71 = arith.constant 0 : index
    %235 = vector.load %arg3[%c22_69, %c0_70, %c0_71] : memref<25x8x128xf32, #tpu.memory_space<vmem>>, vector<1x8x128xf32>
    %236 = vector.shape_cast %235 : vector<1x8x128xf32> to vector<8x128xf32>
    %237 = vector.shape_cast %224 : vector<8x128xf32> to vector<1x8x128xf32>
    tpu.vector_store %arg3[%c22_69, %c0_70, %c0_71], %237 {strides = array<i32>} : memref<25x8x128xf32, #tpu.memory_space<vmem>>, vector<1x8x128xf32>,
    %c20_72 = arith.constant 20 : index
    %c0_73 = arith.constant 0 : index
    %c0_74 = arith.constant 0 : index
    %238 = vector.load %arg3[%c20_72, %c0_73, %c0_74] : memref<25x8x128xf32, #tpu.memory_space<vmem>>, vector<1x8x128xf32>
    %239 = vector.shape_cast %238 : vector<1x8x128xf32> to vector<8x128xf32>
    %240 = vector.shape_cast %222 : vector<8x128xf32> to vector<1x8x128xf32>
    tpu.vector_store %arg3[%c20_72, %c0_73, %c0_74], %240 {strides = array<i32>} : memref<25x8x128xf32, #tpu.memory_space<vmem>>, vector<1x8x128xf32>,
    %c23_75 = arith.constant 23 : index
    %c0_76 = arith.constant 0 : index
    %c0_77 = arith.constant 0 : index
    %241 = vector.load %arg3[%c23_75, %c0_76, %c0_77] : memref<25x8x128xf32, #tpu.memory_space<vmem>>, vector<1x8x128xf32>
    %242 = vector.shape_cast %241 : vector<1x8x128xf32> to vector<8x128xf32>
    %243 = vector.shape_cast %225 : vector<8x128xf32> to vector<1x8x128xf32>
    tpu.vector_store %arg3[%c23_75, %c0_76, %c0_77], %243 {strides = array<i32>} : memref<25x8x128xf32, #tpu.memory_space<vmem>>, vector<1x8x128xf32>,
    %c45 = arith.constant 45 : index
    %244 = memref.load %arg2[%c45] : memref<49xf32, #tpu.memory_space<smem>>
    %245 = vector.broadcast %244 : f32 to vector<8x128xf32>
    %246 = arith.mulf %223, %245 : vector<8x128xf32>
    %c46 = arith.constant 46 : index
    %247 = memref.load %arg2[%c46] : memref<49xf32, #tpu.memory_space<smem>>
    %248 = vector.broadcast %247 : f32 to vector<8x128xf32>
    %249 = arith.mulf %224, %248 : vector<8x128xf32>
    %250 = arith.addf %246, %249 : vector<8x128xf32>
    %c47 = arith.constant 47 : index
    %251 = memref.load %arg2[%c47] : memref<49xf32, #tpu.memory_space<smem>>
    %252 = vector.broadcast %251 : f32 to vector<8x128xf32>
    %253 = arith.mulf %225, %252 : vector<8x128xf32>
    %254 = arith.addf %250, %253 : vector<8x128xf32>
    %c48 = arith.constant 48 : index
    %255 = memref.load %arg2[%c48] : memref<49xf32, #tpu.memory_space<smem>>
    %256 = vector.broadcast %255 : f32 to vector<8x128xf32>
    %257 = arith.addf %254, %256 : vector<8x128xf32>
    %c24_78 = arith.constant 24 : index
    %c0_79 = arith.constant 0 : index
    %c0_80 = arith.constant 0 : index
    %258 = vector.load %arg3[%c24_78, %c0_79, %c0_80] : memref<25x8x128xf32, #tpu.memory_space<vmem>>, vector<1x8x128xf32>
    %259 = vector.shape_cast %258 : vector<1x8x128xf32> to vector<8x128xf32>
    %260 = vector.shape_cast %257 : vector<8x128xf32> to vector<1x8x128xf32>
    tpu.vector_store %arg3[%c24_78, %c0_79, %c0_80], %260 {strides = array<i32>} : memref<25x8x128xf32, #tpu.memory_space<vmem>>, vector<1x8x128xf32>,
    return
  }
  func.func @transform_0(%arg0: i32) -> (i32, i32, i32) {
    %c0_i32 = arith.constant 0 : i32
    %c0_i32_0 = arith.constant 0 : i32
    %c0_i32_1 = arith.constant 0 : i32
    return %c0_i32, %arg0, %c0_i32_0 : i32, i32, i32
  }
  func.func @transform_1(%arg0: i32) -> i32 {
    %c0_i32 = arith.constant 0 : i32
    %c0_i32_0 = arith.constant 0 : i32
    return %c0_i32 : i32
  }
  func.func @transform_2(%arg0: i32) -> (i32, i32, i32) {
    %c0_i32 = arith.constant 0 : i32
    %c0_i32_0 = arith.constant 0 : i32
    %c0_i32_1 = arith.constant 0 : i32
    return %c0_i32, %arg0, %c0_i32_0 : i32, i32, i32
  }
}

</mosaic_0001>

<llo_original>
// kernel: spirals_classifier_3d.1
$region0: #{spirals_classifier_3d.1}
  #allocation0 [shape = 'u32[]', space=smem, size = 0x4, offset = 0x4, fixed_abs, tag = 'smem constant byte address 0x4 - core index']
  #allocation1 [shape = 'u32[72,128]{1,0:T(1,128)}', space=vmem, size = 0x9000, scoped, tag = 'internal scratch']
  %s0 = inlined_call_operand.vmem [shape: f32[2,24,128], index: 0, kind: input, shape index: {}]
  %s1 = inlined_call_operand.vmem [shape: f32[49], index: 1, kind: input, shape index: {}]
  %s2 = inlined_call_operand.vmem [shape: f32[25,24,128], index: 2, kind: output, shape index: {}]
  %s3 = sld [smem:[#allocation0]]
  $region117: #{spirals_classifier_3d.1} parent=0
    _
  %s5 = ssub.s32 1, %s3
  %s6 = scalar_select 0, %s5, %s3
  $region1: #{spirals_classifier_3d.1} parent=0
    #allocation2 [shape = 'u8[16384]{0}', space=vmem, size = 0x4000, scoped, tag = 'input window, operand 0']
    #allocation3 [shape = 'u8[512]{0}', space=smem, size = 0x200, scoped, tag = 'input window, operand 1, single buffered']
    #allocation4 [shape = 's32[2]{0}', space=sflag, size = 0x8, scoped, tag = 'scoped memory for spirals_classifier_3d.1']
    #allocation5 [shape = 'u8[204800]{0}', space=vmem, size = 0x32000, scoped, tag = 'output window, operand 0']
    %7 = vsyncpa [#allocation4], 0
    loop: start=0, step=1, limit=5
    $region2: #{spirals_classifier_3d.1} parent=1 // loop_pre_header
      _
    $region3: #{spirals_classifier_3d.1} parent=1 // loop_header
      %s9 = sphi 0, %s13
      %p10 = scmp.ge.s32.totalorder %s9, 5
      %s19 = sphi 0, %s21
      %s22 = sphi 0, %s19
      %s23 = sphi 0, %s22
      %s39 = sphi 0, %s23
      %s43 = sphi 0, %s43
      %s45 = sphi 0, %s43
      %s46 = sphi 0, %s45
      %s60 = sphi 0, %s46
      %s66 = sphi 0, %s68
      %s69 = sphi 0, %s66
      %s70 = sphi 0, %s69
      %s86 = sphi 0, %s70
    $region4: #{spirals_classifier_3d.1} parent=1 // loop_header_branch
      %12 = sbr.rel (%p10) target = $region8
    $region5: #{spirals_classifier_3d.1} parent=1 // loop_body
      %s14 = ssub.s32 %s9, 1
      %s15 = ssub.s32 %s9, 2
      %s16 = sadd.s32 %s9, 1
      %s17 = ssub.s32 %s9, %s16
      %p18 = scmp.eq.s32.totalorder %s17, 0
      %s20 = sadd.s32 %s19, 1
      %s21 = scalar_select %p18, %s19, %s20
      %p24 = pneg %p18
      %p25 = scmp.eq.s32.totalorder %s9, 2
      %p26 = por %p24, %p25
      %p27 = scmp.ne.s32.totalorder %s19, %s22
      %p28 = scmp.eq.s32.totalorder %s9, 0
      %p29 = por %p27, %p28
      %p30 = scmp.ne.s32.totalorder %s19, %s22
      %p31 = scmp.eq.s32.totalorder %s14, 2
      %p32 = por %p30, %p31
      %p33 = scmp.ne.s32.totalorder %s22, %s23
      %p34 = scmp.eq.s32.totalorder %s14, 0
      %p35 = por %p33, %p34
      %p36 = scmp.ne.s32.totalorder %s22, %s23
      %p37 = scmp.eq.s32.totalorder %s15, 2
      %p38 = por %p36, %p37
      %p40 = scmp.ne.s32.totalorder %s23, %s39
      %p41 = scmp.eq.s32.totalorder %s15, 0
      %p42 = por %p40, %p41
      %s44 = sadd.s32 %s43, 1
      %p47 = scmp.eq.s32.totalorder %s9, 2
      %p48 = scmp.ne.s32.totalorder %s43, %s45
      %p49 = scmp.eq.s32.totalorder %s9, 0
      %p50 = por %p48, %p49
      %p51 = scmp.ne.s32.totalorder %s43, %s45
      %p52 = scmp.eq.s32.totalorder %s14, 2
      %p53 = por %p51, %p52
      %p54 = scmp.ne.s32.totalorder %s45, %s46
      %p55 = scmp.eq.s32.totalorder %s14, 0
      %p56 = por %p54, %p55
      %p57 = scmp.ne.s32.totalorder %s45, %s46
      %p58 = scmp.eq.s32.totalorder %s15, 2
      %p59 = por %p57, %p58
      %p61 = scmp.ne.s32.totalorder %s46, %s60
      %p62 = scmp.eq.s32.totalorder %s15, 0
      %p63 = por %p61, %p62
      %s64 = ssub.s32 %s9, %s16
      %p65 = scmp.eq.s32.totalorder %s64, 0
      %s67 = sadd.s32 %s66, 1
      %s68 = scalar_select %p65, %s66, %s67
      %p71 = pneg %p65
      %p72 = scmp.eq.s32.totalorder %s9, 2
      %p73 = por %p71, %p72
      %p74 = scmp.ne.s32.totalorder %s66, %s69
      %p75 = scmp.eq.s32.totalorder %s9, 0
      %p76 = por %p74, %p75
      %p77 = scmp.ne.s32.totalorder %s66, %s69
      %p78 = scmp.eq.s32.totalorder %s14, 2
      %p79 = por %p77, %p78
      %p80 = scmp.ne.s32.totalorder %s69, %s70
      %p81 = scmp.eq.s32.totalorder %s14, 0
      %p82 = por %p80, %p81
      %p83 = scmp.ne.s32.totalorder %s69, %s70
      %p84 = scmp.eq.s32.totalorder %s15, 2
      %p85 = por %p83, %p84
      %p87 = scmp.ne.s32.totalorder %s70, %s86
      %p88 = scmp.eq.s32.totalorder %s15, 0
      %p89 = por %p87, %p88
      %p90 = scmp.le.s32.totalorder 1, %s9
      %p91 = scmp.lt.s32.totalorder %s9, 4
      %p92 = pnand %p90, %p91
      %p93 = pneg %p92
      // Predicated region
      $region9: #{spirals_classifier_3d.1} parent=5 // pred_check
        _
      $region10: #{spirals_classifier_3d.1} parent=5 // pred_check_branch
        %95 = sbr.rel (%p92) target = $region12
      $region11: #{spirals_classifier_3d.1} parent=5 // pred_region
        %s96 = ssub.s32 %s9, 1
        // Predicated region
        $region13: #{spirals_classifier_3d.1} parent=11 // pred_check
          %p97 = pneg %p56
        $region14: #{spirals_classifier_3d.1} parent=11 // pred_check_branch
          %99 = sbr.rel (%p97) target = $region16
        $region15: #{spirals_classifier_3d.1} parent=11 // pred_region
          %101 = vsyncadd [#allocation4], 0
          %s103 = sshll.u32 %s1, 4
          %s104 = int_to_ptr.vmem [resolvable:$true] %s103
          %106 = dma.vmem_to_smem %s104, 16, [#allocation3], [#allocation4]
        $region16: #{spirals_classifier_3d.1} parent=11 // pred_fallthru
          _
      $region12: #{spirals_classifier_3d.1} parent=5 // pred_fallthru
        _
      %p107 = scmp.lt.s32.totalorder %s9, 3
      // Predicated region
      $region17: #{spirals_classifier_3d.1} parent=5 // pred_check
        %p108 = pneg %p107
      $region18: #{spirals_classifier_3d.1} parent=5 // pred_check_branch
        %110 = sbr.rel (%p108) target = $region20
      $region19: #{spirals_classifier_3d.1} parent=5 // pred_region
        // Predicated region
        $region21: #{spirals_classifier_3d.1} parent=19 // pred_check
          %p111 = pneg %p29
        $region22: #{spirals_classifier_3d.1} parent=19 // pred_check_branch
          %113 = sbr.rel (%p111) target = $region24
        $region23: #{spirals_classifier_3d.1} parent=19 // pred_region
          %s114 = sand.u32 %s19, 1
          %s115 = sand.u32 %s19, 1
          %s116 = smul.addr %s115, 16
          %s117 = scalar_lea.vmem [#allocation2], %s116
          %s118 = smul.addr %s9, 8
          %s119 = scalar_lea.vmem %s0, %s118
          // Predicated region
          $region25: #{spirals_classifier_3d.1} parent=23 // pred_check
            _
          $region26: #{spirals_classifier_3d.1} parent=23 // pred_check_branch
            %121 = sbr.rel (0) target = $region28
          $region27: #{spirals_classifier_3d.1} parent=23 // pred_region
            // Predicated region
            $region29: #{spirals_classifier_3d.1} parent=27 // pred_check
              _
            $region30: #{spirals_classifier_3d.1} parent=27 // pred_check_branch
              %123 = sbr.rel (0) target = $region32
            $region31: #{spirals_classifier_3d.1} parent=27 // pred_region
              // Predicated region
              $region44: #{spirals_classifier_3d.1} parent=31 // pred_check
                _
              $region45: #{spirals_classifier_3d.1} parent=31 // pred_check_branch
                %141 = sbr.rel (0) target = $region47
              $region46: #{spirals_classifier_3d.1} parent=31 // pred_region
                loop: start=0, step=1, limit=1
                $region48: #{spirals_classifier_3d.1} parent=46 // loop_pre_header
                  _
                $region49: #{spirals_classifier_3d.1} parent=46 // loop_header
                  %s143 = sphi 0, %s147
                  %p144 = scmp.ge.s32.totalorder %s143, 1
                  %s148 = sphi %s119, %s119
                  %s149 = sphi %s117, %s117
                $region50: #{spirals_classifier_3d.1} parent=46 // loop_header_branch
                  %146 = sbr.rel (%p144) target = $region54
                $region51: #{spirals_classifier_3d.1} parent=46 // loop_body
                  %v150 = vld [vmem:[%s148] sm:$0xff]
                  %151 = vst [vmem:[%s149] sm:$0xff] %v150
                  %v152 = vld [vmem:[%s148 + $0x18] sm:$0xff]
                  %153 = vst [vmem:[%s149 + $0x8] sm:$0xff] %v152
                $region52: #{spirals_classifier_3d.1} parent=46 // loop_footer
                  %s147 = sadd.s32 1, %s143
                $region53: #{spirals_classifier_3d.1} parent=46 // loop_footer_branch
                  %142 = sbr.rel target = $region49
                $region54: #{spirals_classifier_3d.1} parent=46 // loop_exit
                  _
              $region47: #{spirals_classifier_3d.1} parent=31 // pred_fallthru
                _
              // Predicated region
              $region55: #{spirals_classifier_3d.1} parent=31 // pred_check
                _
              $region56: #{spirals_classifier_3d.1} parent=31 // pred_check_branch
                %155 = sbr.rel target = $region58
              $region57: #{spirals_classifier_3d.1} parent=31 // pred_region
                _
              $region58: #{spirals_classifier_3d.1} parent=31 // pred_fallthru
                _
            $region32: #{spirals_classifier_3d.1} parent=27 // pred_fallthru
              _
            // Predicated region
            $region33: #{spirals_classifier_3d.1} parent=27 // pred_check
              _
            $region34: #{spirals_classifier_3d.1} parent=27 // pred_check_branch
              %125 = sbr.rel target = $region36
            $region35: #{spirals_classifier_3d.1} parent=27 // pred_region
              %s127 = ssub.s32 256, 1
              loop: start=0, step=1, limit=1
              $region37: #{spirals_classifier_3d.1} parent=35 // loop_pre_header
                _
              $region38: #{spirals_classifier_3d.1} parent=35 // loop_header
                %s129 = sphi 0, %s133
                %p130 = scmp.ge.s32.totalorder %s129, 1
                %s134 = sphi %s119, %s119
                %s135 = sphi %s117, %s117
              $region39: #{spirals_classifier_3d.1} parent=35 // loop_header_branch
                %132 = sbr.rel (%p130) target = $region43
              $region40: #{spirals_classifier_3d.1} parent=35 // loop_body
                %v136 = vld [vmem:[%s134] sm:%s127]
                %137 = vst [vmem:[%s135] sm:%s127] %v136
                %v138 = vld [vmem:[%s134 + $0x18] sm:%s127]
                %139 = vst [vmem:[%s135 + $0x8] sm:%s127] %v138
              $region41: #{spirals_classifier_3d.1} parent=35 // loop_footer
                %s133 = sadd.s32 1, %s129
              $region42: #{spirals_classifier_3d.1} parent=35 // loop_footer_branch
                %128 = sbr.rel target = $region38
              $region43: #{spirals_classifier_3d.1} parent=35 // loop_exit
                _
            $region36: #{spirals_classifier_3d.1} parent=27 // pred_fallthru
              _
          $region28: #{spirals_classifier_3d.1} parent=23 // pred_fallthru
            _
          %156 = vnop
        $region24: #{spirals_classifier_3d.1} parent=19 // pred_fallthru
          _
      $region20: #{spirals_classifier_3d.1} parent=5 // pred_fallthru
        _
      %p157 = scmp.le.s32.totalorder 1, %s9
      %p158 = scmp.lt.s32.totalorder %s9, 4
      %p159 = pnand %p157, %p158
      %p160 = pneg %p159
      // Predicated region
      $region59: #{spirals_classifier_3d.1} parent=5 // pred_check
        _
      $region60: #{spirals_classifier_3d.1} parent=5 // pred_check_branch
        %162 = sbr.rel (%p159) target = $region62
      $region61: #{spirals_classifier_3d.1} parent=5 // pred_region
        %s163 = ssub.s32 %s9, 1
        %s164 = sand.u32 %s22, 1
        %s165 = sand.u32 %s22, 1
        %s166 = smul.addr %s165, 16
        %s167 = scalar_lea.vmem [#allocation2], %s166
        // Predicated region
        $region63: #{spirals_classifier_3d.1} parent=61 // pred_check
          %p168 = pneg %p35
        $region64: #{spirals_classifier_3d.1} parent=61 // pred_check_branch
          %170 = sbr.rel (%p168) target = $region66
        $region65: #{spirals_classifier_3d.1} parent=61 // pred_region
          _
        $region66: #{spirals_classifier_3d.1} parent=61 // pred_fallthru
          _
        // Predicated region
        $region67: #{spirals_classifier_3d.1} parent=61 // pred_check
          %p171 = pneg %p56
        $region68: #{spirals_classifier_3d.1} parent=61 // pred_check_branch
          %173 = sbr.rel (%p171) target = $region70
        $region69: #{spirals_classifier_3d.1} parent=61 // pred_region
          %175 = dma.done [#allocation4], 16
        $region70: #{spirals_classifier_3d.1} parent=61 // pred_fallthru
          _
        %176 = sfence
        %s177 = sand.u32 %s22, 1
        %s178 = sand.u32 %s22, 1
        %s179 = smul.addr %s178, 16
        %s180 = scalar_lea.vmem [#allocation2], %s179
        %p181 = pneg %p35
        %p182 = pneg %p32
        %p183 = pneg %p56
        %p184 = pneg %p53
        %p185 = pneg %p82
        %p186 = pneg %p79
        %s187 = sand.u32 %s69, 1
        %s188 = sand.u32 %s69, 1
        %s189 = smul.addr %s188, 200
        %s190 = scalar_lea.vmem [#allocation5], %s189
        %v191 = vld [vmem:[%s167] sm:$0xff]
        %s192 = scalar_lea.vmem %s167, 8 [#allocation2]
        %v193 = vld [vmem:[%s192] sm:$0xff]
        %s194 = sld [smem:[#allocation3]]
        %v195 = vstv %s194
        %v196 = vmul.f32 %v191, %v195
        %s197 = sld [smem:[#allocation3 + $0x1]]
        %v198 = vstv %s197
        %v199 = vmul.f32 %v193, %v198
        %v200 = vadd.f32 %v196, %v199
        %s201 = sld [smem:[#allocation3 + $0x6]]
        %v202 = vstv %s201
        %v203 = vadd.f32 %v200, %v202
        %s204 = sld [smem:[#allocation3 + $0x2]]
        %v205 = vstv %s204
        %v206 = vmul.f32 %v191, %v205
        %s207 = sld [smem:[#allocation3 + $0x3]]
        %v208 = vstv %s207
        %v209 = vmul.f32 %v193, %v208
        %v210 = vadd.f32 %v206, %v209
        %s211 = sld [smem:[#allocation3 + $0x7]]
        %v212 = vstv %s211
        %v213 = vadd.f32 %v210, %v212
        %s214 = sld [smem:[#allocation3 + $0x4]]
        %v215 = vstv %s214
        %v216 = vmul.f32 %v191, %v215
        %s217 = sld [smem:[#allocation3 + $0x5]]
        %v218 = vstv %s217
        %v219 = vmul.f32 %v193, %v218
        %v220 = vadd.f32 %v216, %v219
        %s221 = sld [smem:[#allocation3 + $0x8]]
        %v222 = vstv %s221
        %v223 = vadd.f32 %v220, %v222
        %v224 = vtanh.pop %v203
        %v225 = vtanh.pop %v213
        %v226 = vtanh.pop %v223
        %227 = vst [vmem:[%s190] sm:$0xff] %v203
        %s228 = scalar_lea.vmem %s190, 24 [#allocation5]
        %229 = vst [vmem:[%s228] sm:$0xff] %v224
        %s230 = scalar_lea.vmem %s190, 8 [#allocation5]
        %231 = vst [vmem:[%s230] sm:$0xff] %v213
        %s232 = scalar_lea.vmem %s190, 32 [#allocation5]
        %233 = vst [vmem:[%s232] sm:$0xff] %v225
        %s234 = scalar_lea.vmem %s190, 16 [#allocation5]
        %235 = vst [vmem:[%s234] sm:$0xff] %v223
        %s236 = scalar_lea.vmem %s190, 40 [#allocation5]
        %237 = vst [vmem:[%s236] sm:$0xff] %v226
        %s238 = sld [smem:[#allocation3 + $0x9]]
        %v239 = vstv %s238
        %v240 = vmul.f32 %v224, %v239
        %s241 = sld [smem:[#allocation3 + $0xa]]
        %v242 = vstv %s241
        %v243 = vmul.f32 %v225, %v242
        %v244 = vadd.f32 %v240, %v243
        %s245 = sld [smem:[#allocation3 + $0xb]]
        %v246 = vstv %s245
        %v247 = vmul.f32 %v226, %v246
        %v248 = vadd.f32 %v244, %v247
        %s249 = sld [smem:[#allocation3 + $0x12]]
        %v250 = vstv %s249
        %v251 = vadd.f32 %v248, %v250
        %s252 = sld [smem:[#allocation3 + $0xc]]
        %v253 = vstv %s252
        %v254 = vmul.f32 %v224, %v253
        %s255 = sld [smem:[#allocation3 + $0xd]]
        %v256 = vstv %s255
        %v257 = vmul.f32 %v225, %v256
        %v258 = vadd.f32 %v254, %v257
        %s259 = sld [smem:[#allocation3 + $0xe]]
        %v260 = vstv %s259
        %v261 = vmul.f32 %v226, %v260
        %v262 = vadd.f32 %v258, %v261
        %s263 = sld [smem:[#allocation3 + $0x13]]
        %v264 = vstv %s263
        %v265 = vadd.f32 %v262, %v264
        %s266 = sld [smem:[#allocation3 + $0xf]]
        %v267 = vstv %s266
        %v268 = vmul.f32 %v224, %v267
        %s269 = sld [smem:[#allocation3 + $0x10]]
        %v270 = vstv %s269
        %v271 = vmul.f32 %v225, %v270
        %v272 = vadd.f32 %v268, %v271
        %s273 = sld [smem:[#allocation3 + $0x11]]
        %v274 = vstv %s273
        %v275 = vmul.f32 %v226, %v274
        %v276 = vadd.f32 %v272, %v275
        %s277 = sld [smem:[#allocation3 + $0x14]]
        %v278 = vstv %s277
        %v279 = vadd.f32 %v276, %v278
        %v280 = vtanh.pop %v251
        %v281 = vtanh.pop %v265
        %v282 = vtanh.pop %v279
        %s283 = scalar_lea.vmem %s190, 48 [#allocation5]
        %284 = vst [vmem:[%s283] sm:$0xff] %v251
        %s285 = scalar_lea.vmem %s190, 72 [#allocation5]
        %286 = vst [vmem:[%s285] sm:$0xff] %v280
        %s287 = scalar_lea.vmem %s190, 56 [#allocation5]
        %288 = vst [vmem:[%s287] sm:$0xff] %v265
        %s289 = scalar_lea.vmem %s190, 80 [#allocation5]
        %290 = vst [vmem:[%s289] sm:$0xff] %v281
        %s291 = scalar_lea.vmem %s190, 64 [#allocation5]
        %292 = vst [vmem:[%s291] sm:$0xff] %v279
        %s293 = scalar_lea.vmem %s190, 88 [#allocation5]
        %294 = vst [vmem:[%s293] sm:$0xff] %v282
        %s295 = sld [smem:[#allocation3 + $0x15]]
        %v296 = vstv %s295
        %v297 = vmul.f32 %v280, %v296
        %s298 = sld [smem:[#allocation3 + $0x16]]
        %v299 = vstv %s298
        %v300 = vmul.f32 %v281, %v299
        %v301 = vadd.f32 %v297, %v300
        %s302 = sld [smem:[#allocation3 + $0x17]]
        %v303 = vstv %s302
        %v304 = vmul.f32 %v282, %v303
        %v305 = vadd.f32 %v301, %v304
        %s306 = sld [smem:[#allocation3 + $0x1e]]
        %v307 = vstv %s306
        %v308 = vadd.f32 %v305, %v307
        %s309 = sld [smem:[#allocation3 + $0x18]]
        %v310 = vstv %s309
        %v311 = vmul.f32 %v280, %v310
        %s312 = sld [smem:[#allocation3 + $0x19]]
        %v313 = vstv %s312
        %v314 = vmul.f32 %v281, %v313
        %v315 = vadd.f32 %v311, %v314
        %s316 = sld [smem:[#allocation3 + $0x1a]]
        %v317 = vstv %s316
        %v318 = vmul.f32 %v282, %v317
        %v319 = vadd.f32 %v315, %v318
        %s320 = sld [smem:[#allocation3 + $0x1f]]
        %v321 = vstv %s320
        %v322 = vadd.f32 %v319, %v321
        %s323 = sld [smem:[#allocation3 + $0x1b]]
        %v324 = vstv %s323
        %v325 = vmul.f32 %v280, %v324
        %s326 = sld [smem:[#allocation3 + $0x1c]]
        %v327 = vstv %s326
        %v328 = vmul.f32 %v281, %v327
        %v329 = vadd.f32 %v325, %v328
        %s330 = sld [smem:[#allocation3 + $0x1d]]
        %v331 = vstv %s330
        %v332 = vmul.f32 %v282, %v331
        %v333 = vadd.f32 %v329, %v332
        %s334 = sld [smem:[#allocation3 + $0x20]]
        %v335 = vstv %s334
        %v336 = vadd.f32 %v333, %v335
        %v337 = vtanh.pop %v308
        %v338 = vtanh.pop %v322
        %v339 = vtanh.pop %v336
        %s340 = scalar_lea.vmem %s190, 96 [#allocation5]
        %341 = vst [vmem:[%s340] sm:$0xff] %v308
        %s342 = scalar_lea.vmem %s190, 120 [#allocation5]
        %343 = vst [vmem:[%s342] sm:$0xff] %v337
        %s344 = scalar_lea.vmem %s190, 104 [#allocation5]
        %345 = vst [vmem:[%s344] sm:$0xff] %v322
        %s346 = scalar_lea.vmem %s190, 128 [#allocation5]
        %347 = vst [vmem:[%s346] sm:$0xff] %v338
        %s348 = scalar_lea.vmem %s190, 112 [#allocation5]
        %349 = vst [vmem:[%s348] sm:$0xff] %v336
        %s350 = scalar_lea.vmem %s190, 136 [#allocation5]
        %351 = vst [vmem:[%s350] sm:$0xff] %v339
        %s352 = sld [smem:[#allocation3 + $0x21]]
        %v353 = vstv %s352
        %v354 = vmul.f32 %v337, %v353
        %s355 = sld [smem:[#allocation3 + $0x22]]
        %v356 = vstv %s355
        %v357 = vmul.f32 %v338, %v356
        %v358 = vadd.f32 %v354, %v357
        %s359 = sld [smem:[#allocation3 + $0x23]]
        %v360 = vstv %s359
        %v361 = vmul.f32 %v339, %v360
        %v362 = vadd.f32 %v358, %v361
        %s363 = sld [smem:[#allocation3 + $0x2a]]
        %v364 = vstv %s363
        %v365 = vadd.f32 %v362, %v364
        %s366 = sld [smem:[#allocation3 + $0x24]]
        %v367 = vstv %s366
        %v368 = vmul.f32 %v337, %v367
        %s369 = sld [smem:[#allocation3 + $0x25]]
        %v370 = vstv %s369
        %v371 = vmul.f32 %v338, %v370
        %v372 = vadd.f32 %v368, %v371
        %s373 = sld [smem:[#allocation3 + $0x26]]
        %v374 = vstv %s373
        %v375 = vmul.f32 %v339, %v374
        %v376 = vadd.f32 %v372, %v375
        %s377 = sld [smem:[#allocation3 + $0x2b]]
        %v378 = vstv %s377
        %v379 = vadd.f32 %v376, %v378
        %s380 = sld [smem:[#allocation3 + $0x27]]
        %v381 = vstv %s380
        %v382 = vmul.f32 %v337, %v381
        %s383 = sld [smem:[#allocation3 + $0x28]]
        %v384 = vstv %s383
        %v385 = vmul.f32 %v338, %v384
        %v386 = vadd.f32 %v382, %v385
        %s387 = sld [smem:[#allocation3 + $0x29]]
        %v388 = vstv %s387
        %v389 = vmul.f32 %v339, %v388
        %v390 = vadd.f32 %v386, %v389
        %s391 = sld [smem:[#allocation3 + $0x2c]]
        %v392 = vstv %s391
        %v393 = vadd.f32 %v390, %v392
        %v394 = vtanh.pop %v365
        %v395 = vtanh.pop %v379
        %v396 = vtanh.pop %v393
        %s397 = scalar_lea.vmem %s190, 144 [#allocation5]
        %398 = vst [vmem:[%s397] sm:$0xff] %v365
        %s399 = scalar_lea.vmem %s190, 168 [#allocation5]
        %400 = vst [vmem:[%s399] sm:$0xff] %v394
        %s401 = scalar_lea.vmem %s190, 152 [#allocation5]
        %402 = vst [vmem:[%s401] sm:$0xff] %v379
        %s403 = scalar_lea.vmem %s190, 176 [#allocation5]
        %404 = vst [vmem:[%s403] sm:$0xff] %v395
        %s405 = scalar_lea.vmem %s190, 160 [#allocation5]
        %406 = vst [vmem:[%s405] sm:$0xff] %v393
        %s407 = scalar_lea.vmem %s190, 184 [#allocation5]
        %408 = vst [vmem:[%s407] sm:$0xff] %v396
        %s409 = sld [smem:[#allocation3 + $0x2d]]
        %v410 = vstv %s409
        %v411 = vmul.f32 %v394, %v410
        %s412 = sld [smem:[#allocation3 + $0x2e]]
        %v413 = vstv %s412
        %v414 = vmul.f32 %v395, %v413
        %v415 = vadd.f32 %v411, %v414
        %s416 = sld [smem:[#allocation3 + $0x2f]]
        %v417 = vstv %s416
        %v418 = vmul.f32 %v396, %v417
        %v419 = vadd.f32 %v415, %v418
        %s420 = sld [smem:[#allocation3 + $0x30]]
        %v421 = vstv %s420
        %v422 = vadd.f32 %v419, %v421
        %s423 = scalar_lea.vmem %s190, 192 [#allocation5]
        %424 = vst [vmem:[%s423] sm:$0xff] %v422
        %s425 = sand.u32 %s69, 1
        %s426 = sand.u32 %s69, 1
        %s427 = smul.addr %s426, 200
        %s428 = scalar_lea.vmem [#allocation5], %s427
        // Predicated region
        $region71: #{spirals_classifier_3d.1} parent=61 // pred_check
          %p429 = pneg %p79
        $region72: #{spirals_classifier_3d.1} parent=61 // pred_check_branch
          %431 = sbr.rel (%p429) target = $region74
        $region73: #{spirals_classifier_3d.1} parent=61 // pred_region
          %s432 = smul.addr %s14, 8
          %s433 = scalar_lea.vmem %s2, %s432
          // Predicated region
          $region75: #{spirals_classifier_3d.1} parent=73 // pred_check
            _
          $region76: #{spirals_classifier_3d.1} parent=73 // pred_check_branch
            %435 = sbr.rel (0) target = $region78
          $region77: #{spirals_classifier_3d.1} parent=73 // pred_region
            // Predicated region
            $region79: #{spirals_classifier_3d.1} parent=77 // pred_check
              _
            $region80: #{spirals_classifier_3d.1} parent=77 // pred_check_branch
              %437 = sbr.rel (0) target = $region82
            $region81: #{spirals_classifier_3d.1} parent=77 // pred_region
              // Predicated region
              $region94: #{spirals_classifier_3d.1} parent=81 // pred_check
                _
              $region95: #{spirals_classifier_3d.1} parent=81 // pred_check_branch
                %501 = sbr.rel (0) target = $region97
              $region96: #{spirals_classifier_3d.1} parent=81 // pred_region
                loop: start=0, step=1, limit=1
                $region98: #{spirals_classifier_3d.1} parent=96 // loop_pre_header
                  _
                $region99: #{spirals_classifier_3d.1} parent=96 // loop_header
                  %s503 = sphi 0, %s507
                  %p504 = scmp.ge.s32.totalorder %s503, 1
                  %s508 = sphi %s428, %s428
                  %s509 = sphi %s433, %s433
                $region100: #{spirals_classifier_3d.1} parent=96 // loop_header_branch
                  %506 = sbr.rel (%p504) target = $region104
                $region101: #{spirals_classifier_3d.1} parent=96 // loop_body
                  %v510 = vld [vmem:[%s508] sm:$0xff]
                  %511 = vst [vmem:[%s509] sm:$0xff] %v510
                  %v512 = vld [vmem:[%s508 + $0x8] sm:$0xff]
                  %513 = vst [vmem:[%s509 + $0x18] sm:$0xff] %v512
                  %v514 = vld [vmem:[%s508 + $0x10] sm:$0xff]
                  %515 = vst [vmem:[%s509 + $0x30] sm:$0xff] %v514
                  %v516 = vld [vmem:[%s508 + $0x18] sm:$0xff]
                  %517 = vst [vmem:[%s509 + $0x48] sm:$0xff] %v516
                  %v518 = vld [vmem:[%s508 + $0x20] sm:$0xff]
                  %519 = vst [vmem:[%s509 + $0x60] sm:$0xff] %v518
                  %v520 = vld [vmem:[%s508 + $0x28] sm:$0xff]
                  %521 = vst [vmem:[%s509 + $0x78] sm:$0xff] %v520
                  %v522 = vld [vmem:[%s508 + $0x30] sm:$0xff]
                  %523 = vst [vmem:[%s509 + $0x90] sm:$0xff] %v522
                  %v524 = vld [vmem:[%s508 + $0x38] sm:$0xff]
                  %525 = vst [vmem:[%s509 + $0xa8] sm:$0xff] %v524
                  %v526 = vld [vmem:[%s508 + $0x40] sm:$0xff]
                  %527 = vst [vmem:[%s509 + $0xc0] sm:$0xff] %v526
                  %v528 = vld [vmem:[%s508 + $0x48] sm:$0xff]
                  %529 = vst [vmem:[%s509 + $0xd8] sm:$0xff] %v528
                  %v530 = vld [vmem:[%s508 + $0x50] sm:$0xff]
                  %531 = vst [vmem:[%s509 + $0xf0] sm:$0xff] %v530
                  %v532 = vld [vmem:[%s508 + $0x58] sm:$0xff]
                  %533 = vst [vmem:[%s509 + $0x108] sm:$0xff] %v532
                  %v534 = vld [vmem:[%s508 + $0x60] sm:$0xff]
                  %535 = vst [vmem:[%s509 + $0x120] sm:$0xff] %v534
                  %v536 = vld [vmem:[%s508 + $0x68] sm:$0xff]
                  %537 = vst [vmem:[%s509 + $0x138] sm:$0xff] %v536
                  %v538 = vld [vmem:[%s508 + $0x70] sm:$0xff]
                  %539 = vst [vmem:[%s509 + $0x150] sm:$0xff] %v538
                  %v540 = vld [vmem:[%s508 + $0x78] sm:$0xff]
                  %541 = vst [vmem:[%s509 + $0x168] sm:$0xff] %v540
                  %v542 = vld [vmem:[%s508 + $0x80] sm:$0xff]
                  %543 = vst [vmem:[%s509 + $0x180] sm:$0xff] %v542
                  %v544 = vld [vmem:[%s508 + $0x88] sm:$0xff]
                  %545 = vst [vmem:[%s509 + $0x198] sm:$0xff] %v544
                  %v546 = vld [vmem:[%s508 + $0x90] sm:$0xff]
                  %547 = vst [vmem:[%s509 + $0x1b0] sm:$0xff] %v546
                  %v548 = vld [vmem:[%s508 + $0x98] sm:$0xff]
                  %549 = vst [vmem:[%s509 + $0x1c8] sm:$0xff] %v548
                  %v550 = vld [vmem:[%s508 + $0xa0] sm:$0xff]
                  %551 = vst [vmem:[%s509 + $0x1e0] sm:$0xff] %v550
                  %v552 = vld [vmem:[%s508 + $0xa8] sm:$0xff]
                  %553 = vst [vmem:[%s509 + $0x1f8] sm:$0xff] %v552
                  %v554 = vld [vmem:[%s508 + $0xb0] sm:$0xff]
                  %555 = vst [vmem:[%s509 + $0x210] sm:$0xff] %v554
                  %v556 = vld [vmem:[%s508 + $0xb8] sm:$0xff]
                  %557 = vst [vmem:[%s509 + $0x228] sm:$0xff] %v556
                  %v558 = vld [vmem:[%s508 + $0xc0] sm:$0xff]
                  %559 = vst [vmem:[%s509 + $0x240] sm:$0xff] %v558
                $region102: #{spirals_classifier_3d.1} parent=96 // loop_footer
                  %s507 = sadd.s32 1, %s503
                $region103: #{spirals_classifier_3d.1} parent=96 // loop_footer_branch
                  %502 = sbr.rel target = $region99
                $region104: #{spirals_classifier_3d.1} parent=96 // loop_exit
                  _
              $region97: #{spirals_classifier_3d.1} parent=81 // pred_fallthru
                _
              // Predicated region
              $region105: #{spirals_classifier_3d.1} parent=81 // pred_check
                _
              $region106: #{spirals_classifier_3d.1} parent=81 // pred_check_branch
                %561 = sbr.rel target = $region108
              $region107: #{spirals_classifier_3d.1} parent=81 // pred_region
                _
              $region108: #{spirals_classifier_3d.1} parent=81 // pred_fallthru
                _
            $region82: #{spirals_classifier_3d.1} parent=77 // pred_fallthru
              _
            // Predicated region
            $region83: #{spirals_classifier_3d.1} parent=77 // pred_check
              _
            $region84: #{spirals_classifier_3d.1} parent=77 // pred_check_branch
              %439 = sbr.rel target = $region86
            $region85: #{spirals_classifier_3d.1} parent=77 // pred_region
              %s441 = ssub.s32 256, 1
              loop: start=0, step=1, limit=1
              $region87: #{spirals_classifier_3d.1} parent=85 // loop_pre_header
                _
              $region88: #{spirals_classifier_3d.1} parent=85 // loop_header
                %s443 = sphi 0, %s447
                %p444 = scmp.ge.s32.totalorder %s443, 1
                %s448 = sphi %s428, %s428
                %s449 = sphi %s433, %s433
              $region89: #{spirals_classifier_3d.1} parent=85 // loop_header_branch
                %446 = sbr.rel (%p444) target = $region93
              $region90: #{spirals_classifier_3d.1} parent=85 // loop_body
                %v450 = vld [vmem:[%s448] sm:%s441]
                %451 = vst [vmem:[%s449] sm:%s441] %v450
                %v452 = vld [vmem:[%s448 + $0x8] sm:%s441]
                %453 = vst [vmem:[%s449 + $0x18] sm:%s441] %v452
                %v454 = vld [vmem:[%s448 + $0x10] sm:%s441]
                %455 = vst [vmem:[%s449 + $0x30] sm:%s441] %v454
                %v456 = vld [vmem:[%s448 + $0x18] sm:%s441]
                %457 = vst [vmem:[%s449 + $0x48] sm:%s441] %v456
                %v458 = vld [vmem:[%s448 + $0x20] sm:%s441]
                %459 = vst [vmem:[%s449 + $0x60] sm:%s441] %v458
                %v460 = vld [vmem:[%s448 + $0x28] sm:%s441]
                %461 = vst [vmem:[%s449 + $0x78] sm:%s441] %v460
                %v462 = vld [vmem:[%s448 + $0x30] sm:%s441]
                %463 = vst [vmem:[%s449 + $0x90] sm:%s441] %v462
                %v464 = vld [vmem:[%s448 + $0x38] sm:%s441]
                %465 = vst [vmem:[%s449 + $0xa8] sm:%s441] %v464
                %v466 = vld [vmem:[%s448 + $0x40] sm:%s441]
                %467 = vst [vmem:[%s449 + $0xc0] sm:%s441] %v466
                %v468 = vld [vmem:[%s448 + $0x48] sm:%s441]
                %469 = vst [vmem:[%s449 + $0xd8] sm:%s441] %v468
                %v470 = vld [vmem:[%s448 + $0x50] sm:%s441]
                %471 = vst [vmem:[%s449 + $0xf0] sm:%s441] %v470
                %v472 = vld [vmem:[%s448 + $0x58] sm:%s441]
                %473 = vst [vmem:[%s449 + $0x108] sm:%s441] %v472
                %v474 = vld [vmem:[%s448 + $0x60] sm:%s441]
                %475 = vst [vmem:[%s449 + $0x120] sm:%s441] %v474
                %v476 = vld [vmem:[%s448 + $0x68] sm:%s441]
                %477 = vst [vmem:[%s449 + $0x138] sm:%s441] %v476
                %v478 = vld [vmem:[%s448 + $0x70] sm:%s441]
                %479 = vst [vmem:[%s449 + $0x150] sm:%s441] %v478
                %v480 = vld [vmem:[%s448 + $0x78] sm:%s441]
                %481 = vst [vmem:[%s449 + $0x168] sm:%s441] %v480
                %v482 = vld [vmem:[%s448 + $0x80] sm:%s441]
                %483 = vst [vmem:[%s449 + $0x180] sm:%s441] %v482
                %v484 = vld [vmem:[%s448 + $0x88] sm:%s441]
                %485 = vst [vmem:[%s449 + $0x198] sm:%s441] %v484
                %v486 = vld [vmem:[%s448 + $0x90] sm:%s441]
                %487 = vst [vmem:[%s449 + $0x1b0] sm:%s441] %v486
                %v488 = vld [vmem:[%s448 + $0x98] sm:%s441]
                %489 = vst [vmem:[%s449 + $0x1c8] sm:%s441] %v488
                %v490 = vld [vmem:[%s448 + $0xa0] sm:%s441]
                %491 = vst [vmem:[%s449 + $0x1e0] sm:%s441] %v490
                %v492 = vld [vmem:[%s448 + $0xa8] sm:%s441]
                %493 = vst [vmem:[%s449 + $0x1f8] sm:%s441] %v492
                %v494 = vld [vmem:[%s448 + $0xb0] sm:%s441]
                %495 = vst [vmem:[%s449 + $0x210] sm:%s441] %v494
                %v496 = vld [vmem:[%s448 + $0xb8] sm:%s441]
                %497 = vst [vmem:[%s449 + $0x228] sm:%s441] %v496
                %v498 = vld [vmem:[%s448 + $0xc0] sm:%s441]
                %499 = vst [vmem:[%s449 + $0x240] sm:%s441] %v498
              $region91: #{spirals_classifier_3d.1} parent=85 // loop_footer
                %s447 = sadd.s32 1, %s443
              $region92: #{spirals_classifier_3d.1} parent=85 // loop_footer_branch
                %442 = sbr.rel target = $region88
              $region93: #{spirals_classifier_3d.1} parent=85 // loop_exit
                _
            $region86: #{spirals_classifier_3d.1} parent=77 // pred_fallthru
              _
          $region78: #{spirals_classifier_3d.1} parent=73 // pred_fallthru
            _
          %562 = vnop
        $region74: #{spirals_classifier_3d.1} parent=61 // pred_fallthru
          _
      $region62: #{spirals_classifier_3d.1} parent=5 // pred_fallthru
        _
      %p563 = scmp.le.s32.totalorder 2, %s9
      // Predicated region
      $region109: #{spirals_classifier_3d.1} parent=5 // pred_check
        %p564 = pneg %p563
      $region110: #{spirals_classifier_3d.1} parent=5 // pred_check_branch
        %566 = sbr.rel (%p564) target = $region112
      $region111: #{spirals_classifier_3d.1} parent=5 // pred_region
        %s567 = ssub.s32 %s9, 2
        // Predicated region
        $region113: #{spirals_classifier_3d.1} parent=111 // pred_check
          %p568 = pneg %p85
        $region114: #{spirals_classifier_3d.1} parent=111 // pred_check_branch
          %570 = sbr.rel (%p568) target = $region116
        $region115: #{spirals_classifier_3d.1} parent=111 // pred_region
          %s571 = sand.u32 %s70, 1
          %s572 = sand.u32 %s70, 1
          %s573 = smul.addr %s572, 200
          %s574 = scalar_lea.vmem [#allocation5], %s573
        $region116: #{spirals_classifier_3d.1} parent=111 // pred_fallthru
          _
      $region112: #{spirals_classifier_3d.1} parent=5 // pred_fallthru
        _
    $region6: #{spirals_classifier_3d.1} parent=1 // loop_footer
      %s13 = sadd.s32 1, %s9
    $region7: #{spirals_classifier_3d.1} parent=1 // loop_footer_branch
      %8 = sbr.rel target = $region3
    $region8: #{spirals_classifier_3d.1} parent=1 // loop_exit
      _
    %575 = vsyncpa [#allocation4], 1
    %s576 = scalar_lea.sflag [#allocation4], 1
    %577 = vsyncpa %s576, 1

</llo_original>
